<compile_context>
chip_gen: v5e
topology: v5e:2x2
jax: 0.10.0
libtpu: 0.0.40
codegen_flags: <defaults>
</compile_context>

<pallas_src>
import jax
import jax.numpy as jnp
from jax import lax
from jax.experimental import pallas as pl
from jax.experimental.pallas import tpu as pltpu


def _make_kernel(SUB_TILE, L, needs_mask):
    def kernel(t_ref, x_ref, out_ref):
        # t_ref  : (N,) int32 in SMEM (scalar prefetch)
        # x_ref  : (1, C, SUB_TILE, 128) native dtype in VMEM (C is a leading axis)
        # out_ref: (1, 1, ROWS_OUT, 128) float32 per-step partial block
        n = pl.program_id(0)
        l = pl.program_id(1)
        t = t_ref[n]                                             # scalar int32

        x = x_ref[...].astype(jnp.float32)                       # (1, C, S, 128)

        # log-sum-exp over classes. C is a leading (non-vreg) axis, so the max and
        # sum are plain elementwise ops across C vreg slabs; exp touches only real
        # elements (no sublane padding waste).
        m = jnp.max(x, axis=1, keepdims=True)                    # (1, 1, S, 128)
        lse = jnp.log(jnp.sum(jnp.exp(x - m), axis=1, keepdims=True))

        # logits at the target channel: direct dynamic slice along the leading C
        # axis (base-address arithmetic, no compare/where over the whole tile).
        x_t = x_ref[:, pl.ds(t, 1), :, :].astype(jnp.float32)    # (1, 1, S, 128)

        per_pos = m + lse - x_t                                  # (1, 1, S, 128)

        if needs_mask:
            # Mask rows/lanes beyond the true length L (covers both the partial
            # last row-block and any 128-lane padding). Select => garbage cannot
            # leak even if the unselected branch holds NaN/Inf.
            row = lax.broadcasted_iota(jnp.int32, (1, 1, SUB_TILE, 128), 2)
            lane = lax.broadcasted_iota(jnp.int32, (1, 1, SUB_TILE, 128), 3)
            gpos = (l * SUB_TILE + row) * 128 + lane
            per_pos = jnp.where(gpos < L, per_pos, jnp.float32(0.0))

        if SUB_TILE % 8 == 0 and SUB_TILE > 8:
            # Fold S rows down to one dense (8, 128) tile with tile-aligned static
            # slices + cross-vreg adds (no XLU, no reshape).
            acc = per_pos[:, :, 0:8, :]
            for g in range(1, SUB_TILE // 8):
                acc = acc + per_pos[:, :, g * 8:(g + 1) * 8, :]
            per_pos = acc

        out_ref[...] = per_pos                                   # unmasked dense vst

    return kernel


def _vmem_params():
    """(tile_budget_bytes, vmem_limit_bytes, max_rows) per TPU generation."""
    vmem_phys = None
    try:
        vmem_phys = getattr(pltpu.get_tpu_info(), "vmem_capacity_bytes", None)
    except Exception:
        vmem_phys = None
    if vmem_phys is not None and vmem_phys >= 128 * 1024 * 1024:
        # v5e / v6e: 128 MiB physical VMEM -> bigger blocks, fewer grid steps.
        return 64 * 1024 * 1024, 96 * 1024 * 1024, 64
    # v7x (64 MiB physical) or unknown: stay conservative.
    return 20 * 1024 * 1024, 48 * 1024 * 1024, 32


def _pick_sub_tile(Lr, C, dtype_bytes, budget_bytes, max_rows):
    """Rows-of-128 tile size, sized against a dtype-aware VMEM budget."""
    sublane = {4: 8, 2: 16, 1: 32}.get(dtype_bytes, 8)
    if Lr < sublane:
        return Lr                              # tiny L: take the full row axis
    # Bytes per 128-lane row of the block:
    per_row = (2 * C * 128 * dtype_bytes       # x block, double-buffered
               + 3 * C * 128 * 4               # f32 upcast / exp / broadcast temps
               + 4 * 128 * 4)                  # m / lse / x_t / per_pos rows
    cap = budget_bytes // per_row
    cap = max(sublane, (cap // sublane) * sublane)
    cap = min(cap, max_rows)
    fit = max(sublane, (Lr // sublane) * sublane)   # never exceed the array extent
    return min(cap, fit)


def cross_entropy_loss(inputs, targets):
    """inputs: (N, C, H, W); targets: (N,) int class ids. Returns scalar f32."""
    N, C = inputs.shape[0], inputs.shape[1]
    x = inputs.reshape(N, C, -1)               # (N, C, L), native dtype on the wire
    L = x.shape[2]
    t = targets.astype(jnp.int32).reshape(N)

    dtype_bytes = jnp.dtype(x.dtype).itemsize
    budget, vmem_limit, max_rows = _vmem_params()

    # Lane-major layout (N, C, Lr, 128): a contiguous (copy-free) reshape whenever
    # L % 128 == 0, which is the common case for conv feature maps.
    L128 = ((L + 127) // 128) * 128
    if L128 != L:
        # TODO(synk): the rare L % 128 != 0 case still pays one pad copy to reach
        # the 128-lane boundary; everything else is handled by the in-kernel mask.
        x = jnp.pad(x, ((0, 0), (0, 0), (0, L128 - L)))
    Lr = L128 // 128
    x = x.reshape(N, C, Lr, 128)

    SUB_TILE = _pick_sub_tile(Lr, C, dtype_bytes, budget, max_rows)
    num_l = -(-Lr // SUB_TILE)
    needs_mask = (num_l * SUB_TILE * 128) != L
    rows_out = 8 if SUB_TILE % 8 == 0 else SUB_TILE

    kernel = _make_kernel(SUB_TILE=SUB_TILE, L=L, needs_mask=needs_mask)

    partials = pl.pallas_call(
        kernel,
        out_shape=jax.ShapeDtypeStruct((N, num_l, rows_out, 128), jnp.float32),
        grid_spec=pltpu.PrefetchScalarGridSpec(
            num_scalar_prefetch=1,
            grid=(N, num_l),
            in_specs=[
                pl.BlockSpec((1, C, SUB_TILE, 128),
                             lambda n, l, t_ref: (n, 0, l, 0)),
            ],
            out_specs=pl.BlockSpec((1, 1, rows_out, 128),
                                   lambda n, l, t_ref: (n, l, 0, 0)),
        ),
        compiler_params=pltpu.CompilerParams(
            dimension_semantics=("parallel", "parallel"),
            vmem_limit_bytes=vmem_limit,
        ),
        cost_estimate=pl.CostEstimate(
            flops=6 * N * C * Lr * 128,
            transcendentals=N * (C + 1) * Lr * 128,
            bytes_accessed=(N * C * Lr * 128 * dtype_bytes
                            + N * num_l * rows_out * 128 * 4
                            + N * 4),
        ),
    )(t, x)

    # Tiny dense reduction + normalization outside the kernel.
    return jnp.sum(partials) / jnp.float32(N * L)


def _reference(inputs, targets):
    # Pure-JAX reference mirroring the PyTorch module.
    N, C = inputs.shape[0], inputs.shape[1]
    x = inputs.reshape(N, C, -1).astype(jnp.float32)
    L = x.shape[2]
    log_probs = jax.nn.log_softmax(x, axis=1)
    onehot = jax.nn.one_hot(targets, C, dtype=jnp.float32)[:, :, None]
    loss = jnp.sum(jnp.mean(-onehot * log_probs, axis=0))
    return loss / L


if __name__ == "__main__":
    key = jax.random.PRNGKey(0)
    k1, k2 = jax.random.split(key)

    N, C, H, W = 2, 4, 16, 16
    inputs = jax.random.normal(k1, (N, C, H, W), dtype=jnp.float32)
    targets = jax.random.randint(k2, (N,), 0, C, dtype=jnp.int32)

    loss = cross_entropy_loss(inputs, targets)
    jax.block_until_ready(loss)

    ref = _reference(inputs, targets)
    assert jnp.allclose(loss, ref, rtol=1e-5, atol=1e-5), (loss, ref)

    # TODO(synk): targets are per-image (N,) broadcast over H*W, matching Train.py's
    # CrossEntropyLoss, not torch.nn.CrossEntropyLoss's per-pixel (N,H,W) targets.
    print("KERNEL_OK")
</pallas_src>

<mosaic_0001>
module attributes {stable_mosaic.version = 11 : i64} {
  func.func @kernel(%arg0: i32, %arg1: i32, %arg2: memref<2xi32, #tpu.memory_space<smem>>, %arg3: memref<1x4x2x128xf32, #tpu.memory_space<vmem>>, %arg4: memref<1x1x2x128xf32, #tpu.memory_space<vmem>>) attributes {dimension_semantics = [#tpu.dimension_semantics<parallel>, #tpu.dimension_semantics<parallel>], iteration_bounds = array<i64: 2, 1>, scalar_prefetch = 1 : i64, scratch_operands = 0 : i64, tpu.core_type = #tpu.core_type<tc>, window_params = [{transform_indices = @transform_0, window_bounds = array<i64: 1, 4, 2, 128>}, {transform_indices = @transform_1, window_bounds = array<i64: 1, 1, 2, 128>}]} {
    %0 = arith.index_cast %arg0 : i32 to index
    %1 = memref.load %arg2[%0] : memref<2xi32, #tpu.memory_space<smem>>
    %c0 = arith.constant 0 : index
    %c0_0 = arith.constant 0 : index
    %c0_1 = arith.constant 0 : index
    %c0_2 = arith.constant 0 : index
    %2 = vector.load %arg3[%c0, %c0_0, %c0_1, %c0_2] : memref<1x4x2x128xf32, #tpu.memory_space<vmem>>, vector<1x4x2x128xf32>
    %cst = arith.constant dense<0xFF800000> : vector<1x2x128xf32>
    %3 = vector.multi_reduction <maximumf>, %2, %cst [1] : vector<1x4x2x128xf32> to vector<1x2x128xf32>
    %4 = vector.shape_cast %3 : vector<1x2x128xf32> to vector<1x1x2x128xf32>
    %5 = vector.broadcast %4 : vector<1x1x2x128xf32> to vector<1x4x2x128xf32>
    %6 = arith.subf %2, %5 : vector<1x4x2x128xf32>
    %7 = math.exp %6 : vector<1x4x2x128xf32>
    %cst_3 = arith.constant dense<0.000000e+00> : vector<1x2x128xf32>
    %8 = vector.multi_reduction <add>, %7, %cst_3 [1] : vector<1x4x2x128xf32> to vector<1x2x128xf32>
    %9 = vector.shape_cast %8 : vector<1x2x128xf32> to vector<1x1x2x128xf32>
    %10 = math.log %9 : vector<1x1x2x128xf32>
    %c0_4 = arith.constant 0 : index
    %11 = arith.index_cast %1 : i32 to index
    %c0_5 = arith.constant 0 : index
    %c0_6 = arith.constant 0 : index
    %12 = vector.load %arg3[%c0_4, %11, %c0_5, %c0_6] : memref<1x4x2x128xf32, #tpu.memory_space<vmem>>, vector<1x1x2x128xf32>
    %13 = arith.addf %4, %10 : vector<1x1x2x128xf32>
    %14 = arith.subf %13, %12 : vector<1x1x2x128xf32>
    %c0_7 = arith.constant 0 : index
    %c0_8 = arith.constant 0 : index
    %c0_9 = arith.constant 0 : index
    %c0_10 = arith.constant 0 : index
    %15 = vector.load %arg4[%c0_7, %c0_8, %c0_9, %c0_10] : memref<1x1x2x128xf32, #tpu.memory_space<vmem>>, vector<1x1x2x128xf32>
    tpu.vector_store %arg4[%c0_7, %c0_8, %c0_9, %c0_10], %14 {strides = array<i32>} : memref<1x1x2x128xf32, #tpu.memory_space<vmem>>, vector<1x1x2x128xf32>,
    return
  }
  func.func @transform_0(%arg0: i32, %arg1: i32, %arg2: memref<2xi32, #tpu.memory_space<smem>>) -> (i32, i32, i32, i32) {
    %c0_i32 = arith.constant 0 : i32
    %c0_i32_0 = arith.constant 0 : i32
    %c0_i32_1 = arith.constant 0 : i32
    return %arg0, %c0_i32, %arg1, %c0_i32_0 : i32, i32, i32, i32
  }
  func.func @transform_1(%arg0: i32, %arg1: i32, %arg2: memref<2xi32, #tpu.memory_space<smem>>) -> (i32, i32, i32, i32) {
    %c0_i32 = arith.constant 0 : i32
    %c0_i32_0 = arith.constant 0 : i32
    %c0_i32_1 = arith.constant 0 : i32
    return %arg0, %arg1, %c0_i32, %c0_i32_0 : i32, i32, i32, i32
  }
}

</mosaic_0001>

<llo_original>
// kernel: tpu_custom_call.1
$region0: #{tpu_custom_call.1}
  #allocation0 [shape = 'u32[]', space=smem, size = 0x4, offset = 0x4, fixed_abs, tag = 'smem constant byte address 0x4 - core index']
  #allocation1 [shape = 'u32[72,128]{1,0:T(1,128)}', space=vmem, size = 0x9000, scoped, tag = 'internal scratch']
  #allocation2 [shape = 's32[1]{0}', space=sflag, size = 0x4, scoped, tag = 'scoped memory for tpu_custom_call.1']
  #allocation3 [shape = 'u8[512]{0}', space=smem, size = 0x200, scoped, tag = 'prefetched SMEM operand 0']
  %s0 = inlined_call_operand.hbm [shape: s32[2], index: 0, kind: input, shape index: {}]
  %s1 = inlined_call_operand.hbm [shape: f32[2,4,2,128], index: 1, kind: input, shape index: {}]
  %s2 = inlined_call_operand.hbm [shape: f32[2,1,2,128], index: 2, kind: output, shape index: {}]
  %s3 = sld [smem:[#allocation0]]
  $region41: #{tpu_custom_call.1} parent=0
    _
  %s5 = ssub.s32 1, %s3
  %s6 = scalar_select 0, %s5, %s3
  %s8 = sshll.u32 %s0, 4
  %s9 = int_to_ptr.hbm [resolvable:$true] %s8
  %11 = dma.hbm_to_smem %s9, 16, [#allocation3], [#allocation2]
  %13 = dma.done [#allocation2], 16
  %14 = sfence
  $region1: #{tpu_custom_call.1} parent=0
    #allocation4 [shape = 'u8[8192]{0}', space=vmem, size = 0x2000, scoped, tag = 'input window, operand 1']
    #allocation5 [shape = 's32[2]{0}', space=sflag, size = 0x8, scoped, tag = 'scoped memory for tpu_custom_call.1']
    #allocation6 [shape = 's32[2]{0}', space=sflag, size = 0x8, scoped, tag = 'scoped memory for tpu_custom_call.1']
    #allocation7 [shape = 'u8[2048]{0}', space=vmem, size = 0x800, scoped, tag = 'output window, operand 0']
    %15 = vsyncpa [#allocation5], 0
    %s16 = scalar_lea.sflag [#allocation5], 1
    %17 = vsyncpa %s16, 0
    %18 = vsyncpa [#allocation6], 0
    %s19 = scalar_lea.sflag [#allocation6], 1
    %20 = vsyncpa %s19, 0
    loop: start=0, step=1, limit=4
    $region2: #{tpu_custom_call.1} parent=1 // loop_pre_header
      _
    $region3: #{tpu_custom_call.1} parent=1 // loop_header
      %s22 = sphi 0, %s26
      %p23 = scmp.ge.s32.totalorder %s22, 4
      %s29 = sphi 0, %s41
      %s30 = sphi 0, %s37
      %s31 = sphi 0, %s29
      %s32 = sphi 0, %s30
      %s33 = sphi 0, %s31
      %s34 = sphi 0, %s32
      %s46 = sphi 0, %s48
      %s49 = sphi 0, %s46
      %s50 = sphi 0, %s49
      %s66 = sphi 0, %s50
      %s74 = sphi 0, %s76
      %s77 = sphi 0, %s74
      %s78 = sphi 0, %s77
      %s94 = sphi 0, %s78
    $region4: #{tpu_custom_call.1} parent=1 // loop_header_branch
      %25 = sbr.rel (%p23) target = $region8
    $region5: #{tpu_custom_call.1} parent=1 // loop_body
      %s27 = ssub.s32 %s22, 1
      %s28 = ssub.s32 %s22, 2
      %s35 = sadd.s32 1, %s30
      %p36 = scmp.ge.s32.totalorder %s35, 1
      %s37 = scalar_select %p36, 0, %s35
      %s38 = sadd.s32 1, %s29
      %s39 = scalar_select %p36, %s38, %s29
      %p40 = scmp.ge.s32.totalorder %s39, 2
      %s41 = scalar_select %p40, 0, %s39
      %s42 = ssub.s32 %s29, %s41
      %s43 = ssub.s32 %s30, %s37
      %s44 = sor.u32 %s42, %s43
      %p45 = scmp.eq.s32.totalorder %s44, 0
      %s47 = sadd.s32 %s46, 1
      %s48 = scalar_select %p45, %s46, %s47
      %p51 = pneg %p45
      %p52 = scmp.eq.s32.totalorder %s22, 1
      %p53 = por %p51, %p52
      %p54 = scmp.ne.s32.totalorder %s46, %s49
      %p55 = scmp.eq.s32.totalorder %s22, 0
      %p56 = por %p54, %p55
      %p57 = scmp.ne.s32.totalorder %s46, %s49
      %p58 = scmp.eq.s32.totalorder %s27, 1
      %p59 = por %p57, %p58
      %p60 = scmp.ne.s32.totalorder %s49, %s50
      %p61 = scmp.eq.s32.totalorder %s27, 0
      %p62 = por %p60, %p61
      %p63 = scmp.ne.s32.totalorder %s49, %s50
      %p64 = scmp.eq.s32.totalorder %s28, 1
      %p65 = por %p63, %p64
      %p67 = scmp.ne.s32.totalorder %s50, %s66
      %p68 = scmp.eq.s32.totalorder %s28, 0
      %p69 = por %p67, %p68
      %s70 = ssub.s32 %s29, %s41
      %s71 = ssub.s32 %s30, %s37
      %s72 = sor.u32 %s70, %s71
      %p73 = scmp.eq.s32.totalorder %s72, 0
      %s75 = sadd.s32 %s74, 1
      %s76 = scalar_select %p73, %s74, %s75
      %p79 = pneg %p73
      %p80 = scmp.eq.s32.totalorder %s22, 1
      %p81 = por %p79, %p80
      %p82 = scmp.ne.s32.totalorder %s74, %s77
      %p83 = scmp.eq.s32.totalorder %s22, 0
      %p84 = por %p82, %p83
      %p85 = scmp.ne.s32.totalorder %s74, %s77
      %p86 = scmp.eq.s32.totalorder %s27, 1
      %p87 = por %p85, %p86
      %p88 = scmp.ne.s32.totalorder %s77, %s78
      %p89 = scmp.eq.s32.totalorder %s27, 0
      %p90 = por %p88, %p89
      %p91 = scmp.ne.s32.totalorder %s77, %s78
      %p92 = scmp.eq.s32.totalorder %s28, 1
      %p93 = por %p91, %p92
      %p95 = scmp.ne.s32.totalorder %s78, %s94
      %p96 = scmp.eq.s32.totalorder %s28, 0
      %p97 = por %p95, %p96
      %p98 = scmp.le.s32.totalorder 1, %s22
      %p99 = scmp.lt.s32.totalorder %s22, 3
      %p100 = pnand %p98, %p99
      %p101 = pneg %p100
      // Predicated region
      $region9: #{tpu_custom_call.1} parent=5 // pred_check
        _
      $region10: #{tpu_custom_call.1} parent=5 // pred_check_branch
        %103 = sbr.rel (%p100) target = $region12
      $region11: #{tpu_custom_call.1} parent=5 // pred_region
        %s104 = ssub.s32 %s22, 1
      $region12: #{tpu_custom_call.1} parent=5 // pred_fallthru
        _
      %p105 = scmp.lt.s32.totalorder %s22, 2
      // Predicated region
      $region13: #{tpu_custom_call.1} parent=5 // pred_check
        %p106 = pneg %p105
      $region14: #{tpu_custom_call.1} parent=5 // pred_check_branch
        %108 = sbr.rel (%p106) target = $region16
      $region15: #{tpu_custom_call.1} parent=5 // pred_region
        // Predicated region
        $region17: #{tpu_custom_call.1} parent=15 // pred_check
          %p109 = pneg %p56
        $region18: #{tpu_custom_call.1} parent=15 // pred_check_branch
          %111 = sbr.rel (%p109) target = $region20
        $region19: #{tpu_custom_call.1} parent=15 // pred_region
          %s112 = sand.u32 %s46, 1
          %s113 = scalar_lea.sflag [#allocation5], %s112
          %s114 = sand.u32 %s46, 1
          %s115 = smul.addr %s114, 8
          %s116 = scalar_lea.vmem [#allocation4], %s115
          %118 = vsyncadd %s113, 0
          %s119 = smul.addr %s29, 4
          %s120 = sadd.s32 %s30, %s119
          %s121 = smul.addr %s120, 2
          %s122 = scalar_lea.hbm %s1, %s121
          %s123 = sshll.u32 %s122, 4
          %s124 = int_to_ptr.hbm [resolvable:$true] %s123
          %s125 = sshll.u32 %s116, 4
          %s126 = int_to_ptr.vmem [resolvable:$true] %s125
          %131 = dma.hbm_to_vmem [thread:$0]  %s124, 128, %s126, %s113, 32, 32, 2
        $region20: #{tpu_custom_call.1} parent=15 // pred_fallthru
          _
      $region16: #{tpu_custom_call.1} parent=5 // pred_fallthru
        _
      %p132 = scmp.le.s32.totalorder 1, %s22
      %p133 = scmp.lt.s32.totalorder %s22, 3
      %p134 = pnand %p132, %p133
      %p135 = pneg %p134
      // Predicated region
      $region21: #{tpu_custom_call.1} parent=5 // pred_check
        _
      $region22: #{tpu_custom_call.1} parent=5 // pred_check_branch
        %137 = sbr.rel (%p134) target = $region24
      $region23: #{tpu_custom_call.1} parent=5 // pred_region
        %s138 = ssub.s32 %s22, 1
        %s139 = sand.u32 %s49, 1
        %s140 = scalar_lea.sflag [#allocation5], %s139
        %s141 = sand.u32 %s49, 1
        %s142 = smul.addr %s141, 8
        %s143 = scalar_lea.vmem [#allocation4], %s142
        // Predicated region
        $region25: #{tpu_custom_call.1} parent=23 // pred_check
          %p144 = pneg %p62
        $region26: #{tpu_custom_call.1} parent=23 // pred_check_branch
          %146 = sbr.rel (%p144) target = $region28
        $region27: #{tpu_custom_call.1} parent=23 // pred_region
          %148 = dma.done %s140, 128
        $region28: #{tpu_custom_call.1} parent=23 // pred_fallthru
          _
        %s149 = sand.u32 %s49, 1
        %s150 = scalar_lea.sflag [#allocation5], %s149
        %s151 = sand.u32 %s49, 1
        %s152 = smul.addr %s151, 8
        %s153 = scalar_lea.vmem [#allocation4], %s152
        %p154 = pneg %p62
        %p155 = pneg %p59
        %p156 = pneg %p90
        %p157 = pneg %p87
        %s158 = sand.u32 %s77, 1
        %s159 = scalar_lea.sflag [#allocation6], %s158
        %s160 = sand.u32 %s77, 1
        %s161 = smul.addr %s160, 2
        %s162 = scalar_lea.vmem [#allocation7], %s161
        %s163 = sld [smem:[#allocation3 + %s31]]
        %v164 = vld [vmem:[%s143] sm:$0x3]
        %v165 = vld [vmem:[%s143 + $0x2] sm:$0x3]
        %v166 = vld [vmem:[%s143 + $0x4] sm:$0x3]
        %v167 = vld [vmem:[%s143 + $0x6] sm:$0x3]
        %vm168 = vcmask 1041408
        %v169 = vsel %vm168, %v164, -inf
        %v170 = vsel %vm168, %v165, -inf
        %v171 = vsel %vm168, %v166, -inf
        %v172 = vsel %vm168, %v167, -inf
        %v173 = vmax.f32 %v169, %v170
        %v174 = vmax.f32 %v171, %v172
        %v175 = vmax.f32 %v173, %v174
        %v176 = vsub.f32 %v164, %v175
        %v177 = vsub.f32 %v165, %v175
        %v178 = vsub.f32 %v166, %v175
        %v179 = vsub.f32 %v167, %v175
        %v180 = vmul.f32 %v176, 1.442695
        %v181 = vpow.pop %v180
        %v182 = vmul.f32 %v177, 1.442695
        %v183 = vpow.pop %v182
        %v184 = vmul.f32 %v178, 1.442695
        %v185 = vpow.pop %v184
        %v186 = vmul.f32 %v179, 1.442695
        %v187 = vpow.pop %v186
        %v188 = vsel %vm168, %v181, 0.0
        %v189 = vsel %vm168, %v183, 0.0
        %v190 = vadd.f32 %v188, %v189
        %v191 = vsel %vm168, %v185, 0.0
        %v192 = vadd.f32 %v190, %v191
        %v193 = vsel %vm168, %v187, 0.0
        %v194 = vadd.f32 %v192, %v193
        %v195 = vlog2.pop %v194
        %v196 = vmul.f32 %v195, 0.6931472
        %s197 = smul.u32 %s163, 2
        %s198 = scalar_lea.vmem %s143, %s197 [#allocation4]
        %v199 = vld [vmem:[%s198] sm:$0x3]
        %v200 = vadd.f32 %v175, %v196
        %v201 = vsub.f32 %v200, %v199
        %202 = vst [vmem:[%s162] sm:$0x3] %v201
        %s203 = sand.u32 %s77, 1
        %s204 = scalar_lea.sflag [#allocation6], %s203
        %s205 = sand.u32 %s77, 1
        %s206 = smul.addr %s205, 2
        %s207 = scalar_lea.vmem [#allocation7], %s206
        // Predicated region
        $region29: #{tpu_custom_call.1} parent=23 // pred_check
          %p208 = pneg %p87
        $region30: #{tpu_custom_call.1} parent=23 // pred_check_branch
          %210 = sbr.rel (%p208) target = $region32
        $region31: #{tpu_custom_call.1} parent=23 // pred_region
          %212 = vsyncadd %s204, 0
          %s213 = sadd.s32 %s32, %s31
          %s214 = smul.addr %s213, 2
          %s215 = scalar_lea.hbm %s2, %s214
          %s217 = sshll.u32 %s207, 4
          %s218 = int_to_ptr.vmem [resolvable:$true] %s217
          %s219 = sshll.u32 %s215, 4
          %s220 = int_to_ptr.hbm [resolvable:$true] %s219
          %222 = dma.vmem_to_hbm [thread:$0]  %s218, 32, %s220, %s204
        $region32: #{tpu_custom_call.1} parent=23 // pred_fallthru
          _
      $region24: #{tpu_custom_call.1} parent=5 // pred_fallthru
        _
      %p223 = scmp.le.s32.totalorder 2, %s22
      // Predicated region
      $region33: #{tpu_custom_call.1} parent=5 // pred_check
        %p224 = pneg %p223
      $region34: #{tpu_custom_call.1} parent=5 // pred_check_branch
        %226 = sbr.rel (%p224) target = $region36
      $region35: #{tpu_custom_call.1} parent=5 // pred_region
        %s227 = ssub.s32 %s22, 2
        // Predicated region
        $region37: #{tpu_custom_call.1} parent=35 // pred_check
          %p228 = pneg %p93
        $region38: #{tpu_custom_call.1} parent=35 // pred_check_branch
          %230 = sbr.rel (%p228) target = $region40
        $region39: #{tpu_custom_call.1} parent=35 // pred_region
          %s231 = sand.u32 %s78, 1
          %s232 = scalar_lea.sflag [#allocation6], %s231
          %s233 = sand.u32 %s78, 1
          %s234 = smul.addr %s233, 2
          %s235 = scalar_lea.vmem [#allocation7], %s234
          %237 = dma.done %s232, 32
        $region40: #{tpu_custom_call.1} parent=35 // pred_fallthru
          _
      $region36: #{tpu_custom_call.1} parent=5 // pred_fallthru
        _
    $region6: #{tpu_custom_call.1} parent=1 // loop_footer
      %s26 = sadd.s32 1, %s22
    $region7: #{tpu_custom_call.1} parent=1 // loop_footer_branch
      %21 = sbr.rel target = $region3
    $region8: #{tpu_custom_call.1} parent=1 // loop_exit
      _
    %238 = vsyncpa [#allocation5], 1
    %s239 = scalar_lea.sflag [#allocation5], 1
    %240 = vsyncpa %s239, 1
    %241 = vsyncpa [#allocation6], 1
    %s242 = scalar_lea.sflag [#allocation6], 1
    %243 = vsyncpa %s242, 1

</llo_original>
